<compile_context>
chip_gen: v6e
topology: v6e:2x2x1
jax: 0.10.0
libtpu: 0.0.40
codegen_flags: <defaults>
</compile_context>

<pallas_src>
import functools

import jax
import jax.numpy as jnp
from jax.experimental import pallas as pl
from jax.experimental.pallas import tpu as pltpu


_VMEM_LIMIT_BYTES = 48 * 1024 * 1024   # < 64 MiB physical on v7x; > v5e's 16 MiB default
_LANE_BUDGET_BYTES = 4 * 1024 * 1024   # per-buffer budget, lane-dense (C < 128) path
_ROW_BUDGET_BYTES = 6 * 1024 * 1024    # per-buffer budget, row-tiled (C >= 128) path


# ----------------------------------------------------------------------------
# Kernels
# ----------------------------------------------------------------------------
def _wce_lane_dense_kernel(logits_ref, targets_ref, weights_ref, out_ref, acc_ref,
                           *, n_total):
    """Lane-dense layout: logits (C, TL), targets (1, TL), weights (C, 1)."""
    pid = pl.program_id(0)

    @pl.when(pid == 0)
    def _():
        acc_ref[0] = 0.0   # num = sum_i w[t_i] * (-logp_i[t_i])
        acc_ref[1] = 0.0   # den = sum_i w[t_i]

    x = logits_ref[...].astype(jnp.float32)       # (C, TL)
    t = targets_ref[...]                          # (1, TL) int32
    w = weights_ref[...].astype(jnp.float32)      # (C, 1)
    c, tl = x.shape

    # Column (= sample) validity: excludes OOB columns of a ragged final tile.
    col = pid * tl + jax.lax.broadcasted_iota(jnp.int32, (1, tl), 1)    # (1, TL)
    valid = col < n_total                                               # (1, TL)

    # Gather-free class selection: sublane class iota vs lane-resident targets.
    cls = jax.lax.broadcasted_iota(jnp.int32, (c, 1), 0)                # (C, 1)
    sel = t == cls                                                      # (C, TL)

    # Numerically stable log-sum-exp along the class (sublane) axis.
    m = jnp.max(x, axis=0, keepdims=True)                               # (1, TL)
    lse = jnp.log(jnp.sum(jnp.exp(x - m), axis=0, keepdims=True))       # (1, TL)

    picked_x = jnp.sum(jnp.where(sel, x, 0.0), axis=0, keepdims=True)   # (1, TL)
    per_w = jnp.sum(jnp.where(sel, w, 0.0), axis=0, keepdims=True)      # (1, TL)

    # NaN-safe gating (keep selects, not multiplies): OOB columns hold garbage.
    per_w = jnp.where(valid, per_w, 0.0)
    neg_logp = (m + lse) - picked_x                 # -log_softmax(x)[t]
    contrib = jnp.where(valid, neg_logp * per_w, 0.0)

    acc_ref[0] += jnp.sum(contrib)
    acc_ref[1] += jnp.sum(per_w)

    @pl.when(pid == pl.num_programs(0) - 1)
    def _():
        out_ref[0, 0] = acc_ref[0] / acc_ref[1]


def _wce_row_tiled_kernel(logits_ref, targets_ref, weights_ref, out_ref, acc_ref,
                          *, n_total):
    """Row-tiled layout: logits (TN, C), targets (TN, 1), weights (1, C)."""
    pid = pl.program_id(0)

    @pl.when(pid == 0)
    def _():
        acc_ref[0] = 0.0
        acc_ref[1] = 0.0

    x = logits_ref[...].astype(jnp.float32)       # (TN, C)
    t = targets_ref[...]                          # (TN, 1) int32
    w = weights_ref[...].astype(jnp.float32)      # (1, C)
    tn, c = x.shape

    # Row validity: excludes OOB rows of a ragged final tile.
    row = pid * tn + jax.lax.broadcasted_iota(jnp.int32, (tn, 1), 0)    # (TN, 1)
    valid = row < n_total                                               # (TN, 1)

    cls = jax.lax.broadcasted_iota(jnp.int32, (1, c), 1)                # (1, C)
    sel = cls == t                                                      # (TN, C)

    m = jnp.max(x, axis=-1, keepdims=True)                              # (TN, 1)
    lse = jnp.log(jnp.sum(jnp.exp(x - m), axis=-1, keepdims=True))      # (TN, 1)

    picked_x = jnp.sum(jnp.where(sel, x, 0.0), axis=-1, keepdims=True)  # (TN, 1)
    per_w = jnp.sum(jnp.where(sel, w, 0.0), axis=-1, keepdims=True)     # (TN, 1)

    per_w = jnp.where(valid, per_w, 0.0)
    neg_logp = (m + lse) - picked_x
    contrib = jnp.where(valid, neg_logp * per_w, 0.0)

    acc_ref[0] += jnp.sum(contrib)
    acc_ref[1] += jnp.sum(per_w)

    @pl.when(pid == pl.num_programs(0) - 1)
    def _():
        out_ref[0, 0] = acc_ref[0] / acc_ref[1]


# ----------------------------------------------------------------------------
# Wrappers
# ----------------------------------------------------------------------------
def _cost_estimate(n, c, itemsize):
    return pl.CostEstimate(
        flops=int(8 * n * c),
        transcendentals=int(n * (c + 1)),
        bytes_accessed=int(n * c * itemsize + n * 4 + c * 4 + 4),
    )


def _wce_lane_dense(logits, targets, weights, *, block_cols=None):
    n, c = logits.shape
    itemsize = jnp.dtype(logits.dtype).itemsize

    # Layout plumbing only: put the batch axis on the 128-lane axis.
    logits_t = logits.T                      # (C, N)
    targets2d = targets.reshape(1, n)        # (1, N)
    weights2d = weights.reshape(c, 1)        # (C, 1)

    # VMEM bytes of one batch column per buffer: sublane-padded logits column
    # (padded to 8 rows) + sublane-padded int32 target.
    bytes_per_col = max(c, 8) * itemsize + 8 * 4
    if block_cols is None:
        tl = (_LANE_BUDGET_BYTES // bytes_per_col // 128) * 128
    else:
        tl = (block_cols // 128) * 128
    tl = max(128, tl)
    if n <= tl:
        tl = n                               # single (possibly ragged) tile

    grid = (pl.cdiv(n, tl),)
    kernel = functools.partial(_wce_lane_dense_kernel, n_total=n)

    out = pl.pallas_call(
        kernel,
        out_shape=jax.ShapeDtypeStruct((1, 1), jnp.float32),
        grid_spec=pltpu.PrefetchScalarGridSpec(
            num_scalar_prefetch=0,
            grid=grid,
            in_specs=[
                pl.BlockSpec((c, tl), lambda i: (0, i)),   # streamed logits cols
                pl.BlockSpec((1, tl), lambda i: (0, i)),   # streamed targets
                pl.BlockSpec((c, 1), lambda i: (0, 0)),    # weights resident
            ],
            out_specs=pl.BlockSpec(memory_space=pltpu.MemorySpace.SMEM),
            scratch_shapes=[pltpu.SMEM((2,), jnp.float32)],
        ),
        compiler_params=pltpu.CompilerParams(
            dimension_semantics=("arbitrary",),   # carried SMEM accumulator
            vmem_limit_bytes=_VMEM_LIMIT_BYTES,
        ),
        cost_estimate=_cost_estimate(n, c, itemsize),
    )(logits_t, targets2d, weights2d)
    return out[0, 0]


def _wce_row_tiled(logits, targets, weights, *, block_rows=None):
    n, c = logits.shape
    itemsize = jnp.dtype(logits.dtype).itemsize

    targets2d = targets.reshape(n, 1)        # (N, 1)
    weights2d = weights.reshape(1, c)        # (1, C)

    # VMEM bytes of one batch row per buffer: logits row + 128-lane-padded
    # int32 target (the hidden VMEM hog flagged in the review).
    bytes_per_row = c * itemsize + 128 * 4
    if block_rows is None:
        tn = (_ROW_BUDGET_BYTES // bytes_per_row // 8) * 8
    else:
        tn = (block_rows // 8) * 8
    tn = max(8, tn)
    if n <= tn:
        tn = n                               # single (possibly ragged) tile

    grid = (pl.cdiv(n, tn),)
    kernel = functools.partial(_wce_row_tiled_kernel, n_total=n)

    out = pl.pallas_call(
        kernel,
        out_shape=jax.ShapeDtypeStruct((1, 1), jnp.float32),
        grid_spec=pltpu.PrefetchScalarGridSpec(
            num_scalar_prefetch=0,
            grid=grid,
            in_specs=[
                pl.BlockSpec((tn, c), lambda i: (i, 0)),   # streamed logits rows
                pl.BlockSpec((tn, 1), lambda i: (i, 0)),   # streamed target rows
                pl.BlockSpec((1, c), lambda i: (0, 0)),    # weights resident
            ],
            out_specs=pl.BlockSpec(memory_space=pltpu.MemorySpace.SMEM),
            scratch_shapes=[pltpu.SMEM((2,), jnp.float32)],
        ),
        compiler_params=pltpu.CompilerParams(
            dimension_semantics=("arbitrary",),
            vmem_limit_bytes=_VMEM_LIMIT_BYTES,
        ),
        cost_estimate=_cost_estimate(n, c, itemsize),
    )(logits, targets2d, weights2d)
    return out[0, 0]


def weighted_cross_entropy(logits, targets, class_weights=None, *,
                           block_rows=None, block_cols=None):
    """PyTorch F.cross_entropy(inputs, targets, weight=class_weights), 'mean'.

    logits: (N, C) f32 or bf16 (bf16 recommended at vocab-scale C),
    targets: (N,) int, class_weights: (C,) float or None (-> uniform).
    """
    n, c = logits.shape
    if class_weights is None:
        w = jnp.ones((c,), dtype=jnp.float32)
    else:
        w = jnp.asarray(class_weights, dtype=jnp.float32).reshape(c)
    t = targets.astype(jnp.int32)
    if c < 128:
        return _wce_lane_dense(logits, t, w, block_cols=block_cols)
    return _wce_row_tiled(logits, t, w, block_rows=block_rows)


# ----------------------------------------------------------------------------
# Reference + tests
# ----------------------------------------------------------------------------
def _reference(logits, targets, class_weights):
    logp = jax.nn.log_softmax(logits.astype(jnp.float32), axis=-1)
    picked = jnp.take_along_axis(logp, targets[:, None], axis=-1)[:, 0]
    w_per = class_weights[targets]
    return jnp.sum(-picked * w_per) / jnp.sum(w_per)


if __name__ == "__main__":
    key = jax.random.PRNGKey(0)
    ks = jax.random.split(key, 8)

    num_classes = 6
    class_weights = jnp.array([1.0, 2.0, 0.5, 1.5, 1.0, 3.0], dtype=jnp.float32)

    # --- case 1: module's toy usage (C=6), single ragged tile, lane-dense path
    b1 = 8
    lo1 = jax.random.normal(ks[0], (b1, num_classes), dtype=jnp.float32)
    tg1 = jax.random.randint(ks[1], (b1,), 0, num_classes, dtype=jnp.int32)
    loss1 = jax.block_until_ready(weighted_cross_entropy(lo1, tg1, class_weights))
    ref1 = _reference(lo1, tg1, class_weights)
    assert jnp.allclose(loss1, ref1, rtol=1e-5, atol=1e-5), (loss1, ref1)

    # --- case 2: multi-tile lane-dense streamed reduction with ragged final
    #     tile (exercises the SMEM accumulator + column-validity masking)
    b2 = 300
    lo2 = jax.random.normal(ks[2], (b2, num_classes), dtype=jnp.float32)
    tg2 = jax.random.randint(ks[3], (b2,), 0, num_classes, dtype=jnp.int32)
    loss2 = jax.block_until_ready(
        weighted_cross_entropy(lo2, tg2, class_weights, block_cols=128))
    ref2 = _reference(lo2, tg2, class_weights)
    assert jnp.allclose(loss2, ref2, rtol=1e-5, atol=1e-5), (loss2, ref2)

    # --- case 3: large-C row-tiled path, bf16 logits, ragged final tile
    b3, c3 = 70, 384
    w3 = jax.random.uniform(ks[4], (c3,), dtype=jnp.float32) + 0.5
    lo3 = jax.random.normal(ks[5], (b3, c3), dtype=jnp.float32).astype(jnp.bfloat16)
    tg3 = jax.random.randint(ks[6], (b3,), 0, c3, dtype=jnp.int32)
    loss3 = jax.block_until_ready(
        weighted_cross_entropy(lo3, tg3, w3, block_rows=32))
    ref3 = _reference(lo3.astype(jnp.float32), tg3, w3)
    assert jnp.allclose(loss3, ref3, rtol=1e-4, atol=1e-4), (loss3, ref3)

    # --- case 4: no class weights (plain F.cross_entropy mean reduction)
    loss4 = jax.block_until_ready(weighted_cross_entropy(lo1, tg1, None))
    ref4 = _reference(lo1, tg1, jnp.ones((num_classes,), jnp.float32))
    assert jnp.allclose(loss4, ref4, rtol=1e-5, atol=1e-5), (loss4, ref4)

    print("KERNEL_OK")
</pallas_src>

<mosaic_0001>
module attributes {stable_mosaic.version = 11 : i64} {
  func.func @_wce_lane_dense_kernel(%arg0: i32, %arg1: memref<6x8xf32, #tpu.memory_space<vmem>>, %arg2: memref<1x8xi32, #tpu.memory_space<vmem>>, %arg3: memref<6x1xf32, #tpu.memory_space<vmem>>, %arg4: memref<1x1xf32, #tpu.memory_space<smem>>, %arg5: memref<2xf32, #tpu.memory_space<smem>>) attributes {dimension_semantics = [#tpu.dimension_semantics<arbitrary>], iteration_bounds = array<i64: 1>, scalar_prefetch = 0 : i64, scratch_operands = 1 : i64, tpu.core_type = #tpu.core_type<tc>, window_params = [{transform_indices = @transform_0, window_bounds = array<i64: 6, 8>}, {transform_indices = @transform_1, window_bounds = array<i64: 1, 8>}, {pipeline_mode = #tpu.pipeline_mode<synchronous>, transform_indices = @transform_2, window_bounds = array<i64: 6, 1>}, {transform_indices = @transform_3, window_bounds = array<i64: 1, 1>}]} {
    %c0_i32 = arith.constant 0 : i32
    %0 = arith.cmpi eq, %arg0, %c0_i32 : i32
    %1 = arith.extui %0 : i1 to i32
    %c0_i32_0 = arith.constant 0 : i32
    %2 = arith.cmpi ne, %1, %c0_i32_0 : i32
    scf.if %2 {
      %cst_21 = arith.constant 0.000000e+00 : f32
      %c0_22 = arith.constant 0 : index
      %58 = memref.load %arg5[%c0_22] : memref<2xf32, #tpu.memory_space<smem>>
      memref.store %cst_21, %arg5[%c0_22] : memref<2xf32, #tpu.memory_space<smem>>
      %cst_23 = arith.constant 0.000000e+00 : f32
      %c1_24 = arith.constant 1 : index
      %59 = memref.load %arg5[%c1_24] : memref<2xf32, #tpu.memory_space<smem>>
      memref.store %cst_23, %arg5[%c1_24] : memref<2xf32, #tpu.memory_space<smem>>
    } else {
    }
    %c0 = arith.constant 0 : index
    %c0_1 = arith.constant 0 : index
    %3 = vector.load %arg1[%c0, %c0_1] : memref<6x8xf32, #tpu.memory_space<vmem>>, vector<6x8xf32>
    %c0_2 = arith.constant 0 : index
    %c0_3 = arith.constant 0 : index
    %4 = vector.load %arg2[%c0_2, %c0_3] : memref<1x8xi32, #tpu.memory_space<vmem>>, vector<1x8xi32>
    %c0_4 = arith.constant 0 : index
    %c0_5 = arith.constant 0 : index
    %5 = vector.load %arg3[%c0_4, %c0_5] : memref<6x1xf32, #tpu.memory_space<vmem>>, vector<6x1xf32>
    %c8_i32 = arith.constant 8 : i32
    %6 = arith.muli %arg0, %c8_i32 : i32
    %7 = tpu.iota {dimensions = array<i32: 1>} : vector<1x8xi32>
    %8 = vector.broadcast %6 : i32 to vector<1x8xi32>
    %9 = arith.addi %8, %7 : vector<1x8xi32>
    %c8_i32_6 = arith.constant 8 : i32
    %10 = vector.broadcast %c8_i32_6 : i32 to vector<1x8xi32>
    %11 = arith.cmpi slt, %9, %10 : vector<1x8xi32>
    %12 = tpu.iota {dimensions = array<i32: 0>} : vector<6x1xi32>
    %13 = vector.broadcast %4 : vector<1x8xi32> to vector<6x8xi32>
    %14 = vector.broadcast %12 : vector<6x1xi32> to vector<6x8xi32>
    %15 = arith.cmpi eq, %13, %14 : vector<6x8xi32>
    %cst = arith.constant dense<0xFF800000> : vector<8xf32>
    %16 = vector.multi_reduction <maximumf>, %3, %cst [0] : vector<6x8xf32> to vector<8xf32>
    %17 = vector.shape_cast %16 : vector<8xf32> to vector<1x8xf32>
    %18 = vector.broadcast %17 : vector<1x8xf32> to vector<6x8xf32>
    %19 = arith.subf %3, %18 : vector<6x8xf32>
    %20 = math.exp %19 : vector<6x8xf32>
    %cst_7 = arith.constant dense<0.000000e+00> : vector<8xf32>
    %21 = vector.multi_reduction <add>, %20, %cst_7 [0] : vector<6x8xf32> to vector<8xf32>
    %22 = vector.shape_cast %21 : vector<8xf32> to vector<1x8xf32>
    %23 = math.log %22 : vector<1x8xf32>
    %cst_8 = arith.constant 0.000000e+00 : f32
    %24 = vector.broadcast %cst_8 : f32 to vector<6x8xf32>
    %25 = arith.select %15, %3, %24 : vector<6x8xi1>, vector<6x8xf32>
    %cst_9 = arith.constant dense<0.000000e+00> : vector<8xf32>
    %26 = vector.multi_reduction <add>, %25, %cst_9 [0] : vector<6x8xf32> to vector<8xf32>
    %27 = vector.shape_cast %26 : vector<8xf32> to vector<1x8xf32>
    %cst_10 = arith.constant 0.000000e+00 : f32
    %28 = vector.shape_cast %5 : vector<6x1xf32> to vector<6x1xf32>
    %29 = vector.broadcast %28 : vector<6x1xf32> to vector<6x8xf32>
    %30 = vector.broadcast %cst_10 : f32 to vector<6x8xf32>
    %31 = arith.select %15, %29, %30 : vector<6x8xi1>, vector<6x8xf32>
    %cst_11 = arith.constant dense<0.000000e+00> : vector<8xf32>
    %32 = vector.multi_reduction <add>, %31, %cst_11 [0] : vector<6x8xf32> to vector<8xf32>
    %33 = vector.shape_cast %32 : vector<8xf32> to vector<1x8xf32>
    %cst_12 = arith.constant 0.000000e+00 : f32
    %34 = vector.broadcast %cst_12 : f32 to vector<1x8xf32>
    %35 = arith.select %11, %33, %34 : vector<1x8xi1>, vector<1x8xf32>
    %36 = arith.addf %17, %23 : vector<1x8xf32>
    %37 = arith.subf %36, %27 : vector<1x8xf32>
    %38 = arith.mulf %37, %35 : vector<1x8xf32>
    %cst_13 = arith.constant 0.000000e+00 : f32
    %39 = vector.broadcast %cst_13 : f32 to vector<1x8xf32>
    %40 = arith.select %11, %38, %39 : vector<1x8xi1>, vector<1x8xf32>
    %c0_14 = arith.constant 0 : index
    %41 = memref.load %arg5[%c0_14] : memref<2xf32, #tpu.memory_space<smem>>
    %42 = vector.shape_cast %40 : vector<1x8xf32> to vector<1x1x8xf32>
    %cst_15 = arith.constant dense<0.000000e+00> : vector<1xf32>
    %43 = vector.multi_reduction <add>, %42, %cst_15 [1, 2] : vector<1x1x8xf32> to vector<1xf32>
    %44 = vector.shape_cast %43 : vector<1xf32> to vector<1x1x1xf32>
    %45 = vector.extract %44[0, 0, 0] : f32 from vector<1x1x1xf32>
    %46 = arith.addf %41, %45 : f32
    %c0_16 = arith.constant 0 : index
    %47 = memref.load %arg5[%c0_16] : memref<2xf32, #tpu.memory_space<smem>>
    memref.store %46, %arg5[%c0_16] : memref<2xf32, #tpu.memory_space<smem>>
    %c1 = arith.constant 1 : index
    %48 = memref.load %arg5[%c1] : memref<2xf32, #tpu.memory_space<smem>>
    %49 = vector.shape_cast %35 : vector<1x8xf32> to vector<1x1x8xf32>
    %cst_17 = arith.constant dense<0.000000e+00> : vector<1xf32>
    %50 = vector.multi_reduction <add>, %49, %cst_17 [1, 2] : vector<1x1x8xf32> to vector<1xf32>
    %51 = vector.shape_cast %50 : vector<1xf32> to vector<1x1x1xf32>
    %52 = vector.extract %51[0, 0, 0] : f32 from vector<1x1x1xf32>
    %53 = arith.addf %48, %52 : f32
    %c1_18 = arith.constant 1 : index
    %54 = memref.load %arg5[%c1_18] : memref<2xf32, #tpu.memory_space<smem>>
    memref.store %53, %arg5[%c1_18] : memref<2xf32, #tpu.memory_space<smem>>
    %c0_i32_19 = arith.constant 0 : i32
    %55 = arith.cmpi eq, %arg0, %c0_i32_19 : i32
    %56 = arith.extui %55 : i1 to i32
    %c0_i32_20 = arith.constant 0 : i32
    %57 = arith.cmpi ne, %56, %c0_i32_20 : i32
    scf.if %57 {
      %c0_21 = arith.constant 0 : index
      %58 = memref.load %arg5[%c0_21] : memref<2xf32, #tpu.memory_space<smem>>
      %c1_22 = arith.constant 1 : index
      %59 = memref.load %arg5[%c1_22] : memref<2xf32, #tpu.memory_space<smem>>
      %60 = arith.divf %58, %59 : f32
      %c0_23 = arith.constant 0 : index
      %c0_24 = arith.constant 0 : index
      %61 = memref.load %arg4[%c0_23, %c0_24] : memref<1x1xf32, #tpu.memory_space<smem>>
      memref.store %60, %arg4[%c0_23, %c0_24] : memref<1x1xf32, #tpu.memory_space<smem>>
    } else {
    }
    return
  }
  func.func @transform_0(%arg0: i32) -> (i32, i32) {
    %c0_i32 = arith.constant 0 : i32
    %c0_i32_0 = arith.constant 0 : i32
    return %c0_i32, %arg0 : i32, i32
  }
  func.func @transform_1(%arg0: i32) -> (i32, i32) {
    %c0_i32 = arith.constant 0 : i32
    %c0_i32_0 = arith.constant 0 : i32
    return %c0_i32, %arg0 : i32, i32
  }
  func.func @transform_2(%arg0: i32) -> (i32, i32) {
    %c0_i32 = arith.constant 0 : i32
    %c0_i32_0 = arith.constant 0 : i32
    %c0_i32_1 = arith.constant 0 : i32
    return %c0_i32, %c0_i32_0 : i32, i32
  }
  func.func @transform_3(%arg0: i32) -> (i32, i32) {
    %c0_i32 = arith.constant 0 : i32
    %c0_i32_0 = arith.constant 0 : i32
    %c0_i32_1 = arith.constant 0 : i32
    return %c0_i32, %c0_i32_0 : i32, i32
  }
}

</mosaic_0001>

<llo_original>
// kernel: tpu_custom_call.1
$region0: #{tpu_custom_call.1}
  #allocation0 [shape = 'u32[]', space=smem, size = 0x4, offset = 0x4, fixed_abs, tag = 'smem constant byte address 0x4 - core index']
  #allocation1 [shape = 'u32[144,128]{1,0:T(1,128)}', space=vmem, size = 0x12000, scoped, tag = 'internal scratch']
  #allocation2 [shape = 'f32[2]{0:T(128)}', space=smem, size = 0x200, scoped, tag = 'scratch operand']
  %s0 = inlined_call_operand.vmem [shape: f32[6,8], index: 0, kind: input, shape index: {}]
  %s1 = inlined_call_operand.vmem [shape: s32[1,8], index: 1, kind: input, shape index: {}]
  %s2 = inlined_call_operand.vmem [shape: f32[6,1], index: 2, kind: input, shape index: {}]
  %s3 = inlined_call_operand.hbm [shape: f32[1,1], index: 3, kind: output, shape index: {}]
  %s4 = sld [smem:[#allocation0]]
  $region30: #{tpu_custom_call.1} parent=0
    _
  %s6 = ssub.s32 1, %s4
  %s7 = scalar_select 0, %s6, %s4
  $region1: #{tpu_custom_call.1} parent=0
    #allocation3 [shape = 'u8[512]{0}', space=smem, size = 0x200, scoped, tag = 'output window, operand 0, single buffered']
    #allocation4 [shape = 's32[1]{0}', space=sflag, size = 0x4, scoped, tag = 'scoped memory for tpu_custom_call.1']
    %8 = vsyncpa [#allocation4], 0
    // Predicated region
    $region2: #{tpu_custom_call.1} parent=1 // pred_check
      _
    $region3: #{tpu_custom_call.1} parent=1 // pred_check_branch
      %10 = sbr.rel (0) target = $region5
    $region4: #{tpu_custom_call.1} parent=1 // pred_region
      _
    $region5: #{tpu_custom_call.1} parent=1 // pred_fallthru
      _
    // Predicated region
    $region6: #{tpu_custom_call.1} parent=1 // pred_check
      _
    $region7: #{tpu_custom_call.1} parent=1 // pred_check_branch
      %12 = sbr.rel (0) target = $region9
    $region8: #{tpu_custom_call.1} parent=1 // pred_region
      _
    $region9: #{tpu_custom_call.1} parent=1 // pred_fallthru
      _
    // Predicated region
    $region10: #{tpu_custom_call.1} parent=1 // pred_check
      _
    $region11: #{tpu_custom_call.1} parent=1 // pred_check_branch
      %14 = sbr.rel (0) target = $region13
    $region12: #{tpu_custom_call.1} parent=1 // pred_region
      _
    $region13: #{tpu_custom_call.1} parent=1 // pred_fallthru
      _
    %p15 = scmp.eq.s32.totalorder 0, 0
    // Predicated region
    $region14: #{tpu_custom_call.1} parent=1 // pred_check
      %p16 = pneg %p15
    $region15: #{tpu_custom_call.1} parent=1 // pred_check_branch
      %18 = sbr.rel (%p16) target = $region17
    $region16: #{tpu_custom_call.1} parent=1 // pred_region
      %s19 = scalar_lea.smem [#allocation2], 0
      %20 = sst [smem:[%s19]] 0.0
      %s21 = scalar_lea.smem [#allocation2], 1
      %22 = sst [smem:[%s21]] 0.0
    $region17: #{tpu_custom_call.1} parent=1 // pred_fallthru
      _
    %v23 = vld [vmem:[%s0] sm:$0x3f]
    %v24 = vld [vmem:[%s1] sm:$0x1]
    %v25 = vld [vmem:[%s2] sm:$0x3f]
    %s26 = smul.u32 0, 8
    %v27 = vlaneseq
    %v28 = vand.u32 %v27, 127
    %v29 = vstv %s26
    %v30 = vadd.s32 %v29, %v28
    %vm31 = vcmp.lt.s32.totalorder %v30, 8
    %v32 = vlaneseq
    %v33 = vshrl.u32 %v32, 7
    %v34 = vlaneseq
    %v35 = vshrl.u32 %v34, 7
    %v36 = vsub.s32 0, %v35
    %v37 = vrot.slane %v24, %v36
    %vm38 = vcmp.eq.s32.totalorder %v37, %v33
    %vm39 = vcmask 62464
    %v40 = vsel %vm39, %v23, -inf
    %v41 = vrot.slane %v40, 4
    %v42 = vmax.f32 %v40, %v41
    %v43 = vrot.slane %v42, 2
    %v44 = vmax.f32 %v42, %v43
    %v45 = vrot.slane %v44, 1
    %v46 = vmax.f32 %v44, %v45
    %v47 = vsub.f32 %v23, %v46
    %v48 = vmul.f32 %v47, 1.442695
    %v49 = vpow.pop %v48
    %v50 = vsel %vm39, %v49, 0.0
    %v51 = vrot.slane %v50, 4
    %v52 = vadd.f32 %v50, %v51
    %v53 = vrot.slane %v52, 2
    %v54 = vadd.f32 %v52, %v53
    %v55 = vrot.slane %v54, 1
    %v56 = vadd.f32 %v54, %v55
    %v57 = vlog2.pop %v56
    %v58 = vmul.f32 %v57, 0.6931472
    %v59 = vsel %vm38, %v23, 0.0
    %v60 = vsel %vm39, %v59, 0.0
    %v61 = vrot.slane %v60, 4
    %v62 = vadd.f32 %v60, %v61
    %v63 = vrot.slane %v62, 2
    %v64 = vadd.f32 %v62, %v63
    %v65 = vrot.slane %v64, 1
    %v66 = vadd.f32 %v64, %v65
    %68 = vset.pattern.permute.xlu0 0
    %69 = vperm.xlu0 %68, %v25
    %v70 = vpop.permute.xlu0 %69
    %v72 = vsel %vm38, %v70, 0.0
    %v73 = vsel %vm39, %v72, 0.0
    %v74 = vrot.slane %v73, 4
    %v75 = vadd.f32 %v73, %v74
    %v76 = vrot.slane %v75, 2
    %v77 = vadd.f32 %v75, %v76
    %v78 = vrot.slane %v77, 1
    %v79 = vadd.f32 %v77, %v78
    %v80 = vsel %vm31, %v79, 0.0
    %v81 = vadd.f32 %v46, %v58
    %v82 = vsub.f32 %v81, %v66
    %v83 = vmul.f32 %v82, %v80
    %v84 = vsel %vm31, %v83, 0.0
    %s85 = sld [smem:[#allocation2]]
    %vm86 = vcmask 57344
    %v87 = vsel %vm86, %v84, 0.0
    %88 = vadd.xlane.f32.xlu0 %v87
    %v89 = vpop.xlane.xlu0 %88
    %v90 = vrot.slane %v89, 4
    %v91 = vadd.f32 %v89, %v90
    %v92 = vrot.slane %v91, 2
    %v93 = vadd.f32 %v91, %v92
    %v94 = vrot.slane %v93, 1
    %v95 = vadd.f32 %v93, %v94
    %s96 = vtos %v95
    %s97 = sadd.f32 %s85, %s96
    %s98 = scalar_lea.smem [#allocation2], 0
    %99 = sst [smem:[%s98]] %s97
    %s100 = sld [smem:[#allocation2 + $0x1]]
    %v101 = vsel %vm86, %v80, 0.0
    %102 = vadd.xlane.f32.xlu0 %v101
    %v103 = vpop.xlane.xlu0 %102
    %v104 = vrot.slane %v103, 4
    %v105 = vadd.f32 %v103, %v104
    %v106 = vrot.slane %v105, 2
    %v107 = vadd.f32 %v105, %v106
    %v108 = vrot.slane %v107, 1
    %v109 = vadd.f32 %v107, %v108
    %s110 = vtos %v109
    %s111 = sadd.f32 %s100, %s110
    %s112 = scalar_lea.smem [#allocation2], 1
    %113 = sst [smem:[%s112]] %s111
    // Predicated region
    $region18: #{tpu_custom_call.1} parent=1 // pred_check
      %p114 = pneg %p15
    $region19: #{tpu_custom_call.1} parent=1 // pred_check_branch
      %116 = sbr.rel (%p114) target = $region21
    $region20: #{tpu_custom_call.1} parent=1 // pred_region
      %s117 = sld [smem:[#allocation2]]
      %s118 = sld [smem:[#allocation2 + $0x1]]
      %v119 = vstv %s118
      %v120 = vrcp.pop %v119
      %s121 = vtos %v120
      %s122 = smul.f32 %s117, %s121
      %s123 = scalar_lea.smem [#allocation3], 0
      %124 = sst [smem:[%s123]] %s122
    $region21: #{tpu_custom_call.1} parent=1 // pred_fallthru
      _
    // Predicated region
    $region22: #{tpu_custom_call.1} parent=1 // pred_check
      _
    $region23: #{tpu_custom_call.1} parent=1 // pred_check_branch
      %126 = sbr.rel (0) target = $region25
    $region24: #{tpu_custom_call.1} parent=1 // pred_region
      %s128 = ssub.s32 16, 16
      %129 = vsyncadd [#allocation4], %s128
      %132 = dma.smem_to_hbm [#allocation3], 16, %s3, [#allocation4]
    $region25: #{tpu_custom_call.1} parent=1 // pred_fallthru
      _
    // Predicated region
    $region26: #{tpu_custom_call.1} parent=1 // pred_check
      _
    $region27: #{tpu_custom_call.1} parent=1 // pred_check_branch
      %134 = sbr.rel (0) target = $region29
    $region28: #{tpu_custom_call.1} parent=1 // pred_region
      %135 = dma.done [#allocation4], 16
    $region29: #{tpu_custom_call.1} parent=1 // pred_fallthru
      _
    %136 = sfence
    %137 = vsyncpa [#allocation4], 1

</llo_original>
